<compile_context>
chip_gen: v7x
topology: tpu7x:2x2x1
jax: 0.10.0
libtpu: 0.0.40
codegen_flags: <defaults>
</compile_context>

<pallas_src>
import functools

import jax
import jax.numpy as jnp
from jax.experimental import pallas as pl
from jax.experimental.pallas import tpu as pltpu


# ---------------------------------------------------------------------------
# Kernel 1: tiled global average + max pooling  (B, C, HW) -> (B, C, 2)
# ---------------------------------------------------------------------------
def _pool_kernel(x_ref, pooled_ref, sum_sc, max_sc, *, hw_total, tile_hw):
    # x_ref:      (tc, thw) tile of the input, original dtype
    # pooled_ref: (tc, 2)   [:, 0] = mean, [:, 1] = max  (f32, resident over hw)
    # sum_sc / max_sc: (tc, 1) f32 running accumulators (persist across grid)
    hw = pl.program_id(2)

    @pl.when(hw == 0)
    def _init():
        sum_sc[...] = jnp.zeros_like(sum_sc)
        max_sc[...] = jnp.full_like(max_sc, -jnp.inf)

    xf = x_ref[...].astype(jnp.float32)      # per-tile upcast only (no full-slab copy)

    if hw_total % tile_hw != 0:
        # Last spatial tile is ragged: mask lanes past the true extent.
        col = jax.lax.broadcasted_iota(jnp.int32, xf.shape, 1) + hw * tile_hw
        valid = col < hw_total
        x_sum = jnp.where(valid, xf, 0.0)
        x_max = jnp.where(valid, xf, -jnp.inf)
    else:
        x_sum = xf
        x_max = xf

    # One pass over the tile feeds both reductions, f32 accumulation.
    sum_sc[...] += jnp.sum(x_sum, axis=-1, keepdims=True)
    max_sc[...] = jnp.maximum(max_sc[...], jnp.max(x_max, axis=-1, keepdims=True))

    @pl.when(hw == pl.num_programs(2) - 1)
    def _finalize():
        pooled_ref[:, 0:1] = sum_sc[...] * jnp.float32(1.0 / hw_total)
        pooled_ref[:, 1:2] = max_sc[...]


# ---------------------------------------------------------------------------
# Kernel 2: batched MLP head over both pooled branches  (2B, C) -> (B, C)
# ---------------------------------------------------------------------------
def _mlp_kernel(p_ref, w1t_ref, w2t_ref, o_ref, *, batch):
    # p_ref rows: [avg(b=0..B-1), max(b=0..B-1)] so one well-shaped MXU matmul
    # covers both branches (ReLU is per-row, so this matches per-branch math).
    p = p_ref[...]                                     # (2B, C) f32
    w1t = w1t_ref[...].astype(jnp.float32)             # (C, Cr)
    w2t = w2t_ref[...].astype(jnp.float32)             # (Cr, C)
    h = jnp.maximum(jnp.dot(p, w1t, preferred_element_type=jnp.float32), 0.0)
    o = jnp.dot(h, w2t, preferred_element_type=jnp.float32)   # (2B, C)
    o_ref[...] = jax.nn.sigmoid(o[:batch, :] + o[batch:, :]).astype(o_ref.dtype)


# ---------------------------------------------------------------------------
# Wrapper
# ---------------------------------------------------------------------------
def channel_attention(x, w1, w2, *, tile_hw=2048, tile_c=256):
    """x: (B, C, H, W) NCHW.  w1: (C//16, C) = fc1.weight.squeeze().
    w2: (C, C//16) = fc2.weight.squeeze().  Returns (B, C, 1, 1)."""
    B, C, H, W = x.shape
    HW = H * W
    x_flat = x.reshape(B, C, HW)

    # Spatial tile: multiple of 128 lanes (or full extent when smaller).
    thw = HW if HW <= tile_hw else max(128, (tile_hw // 128) * 128)
    n_hw = pl.cdiv(HW, thw)
    # Channel tile: multiple of 8 sublanes (or full extent when smaller).
    tc = C if C <= tile_c else max(8, (tile_c // 8) * 8)
    n_c = pl.cdiv(C, tc)

    pooled = pl.pallas_call(
        functools.partial(_pool_kernel, hw_total=HW, tile_hw=thw),
        out_shape=jax.ShapeDtypeStruct((B, C, 2), jnp.float32),
        grid_spec=pltpu.PrefetchScalarGridSpec(
            num_scalar_prefetch=0,
            grid=(B, n_c, n_hw),                        # reduction axis (HW) last
            in_specs=[
                pl.BlockSpec((pl.Squeezed(), tc, thw), lambda b, c, h: (b, c, h)),
            ],
            out_specs=pl.BlockSpec((pl.Squeezed(), tc, 2), lambda b, c, h: (b, c, 0)),
            scratch_shapes=[
                pltpu.VMEM((tc, 1), jnp.float32),       # running sum
                pltpu.VMEM((tc, 1), jnp.float32),       # running max
            ],
        ),
        compiler_params=pltpu.CompilerParams(
            dimension_semantics=("parallel", "parallel", "arbitrary"),
        ),
        cost_estimate=pl.CostEstimate(
            flops=2 * B * C * HW,
            transcendentals=0,
            bytes_accessed=B * C * HW * x.dtype.itemsize + B * C * 2 * 4,
        ),
    )(x_flat)

    # Stack both pooled branches for one batched matmul; pass transposed weights
    # so the kernel does row-vector matmuls with no in-kernel transpose.
    p = jnp.concatenate([pooled[:, :, 0], pooled[:, :, 1]], axis=0)   # (2B, C)
    att = pl.pallas_call(
        functools.partial(_mlp_kernel, batch=B),
        out_shape=jax.ShapeDtypeStruct((B, C), jnp.float32),
    )(p, w1.T, w2.T)

    return att.astype(x.dtype).reshape(B, C, 1, 1)


def channel_attention_ref(x, w1, w2):
    """Pure-JAX reference mirroring the PyTorch forward."""
    avg = jnp.mean(x, axis=(2, 3))                           # (B, C)
    mx = jnp.max(x, axis=(2, 3))                             # (B, C)

    def branch(p):
        h = jnp.maximum(p @ w1.T, 0.0)                       # (B, Cr)
        return h @ w2.T                                      # (B, C)

    out = branch(avg) + branch(mx)
    return jax.nn.sigmoid(out)[:, :, None, None].astype(x.dtype)


if __name__ == "__main__":
    key = jax.random.PRNGKey(0)
    k_x, k_w1, k_w2, k_x2 = jax.random.split(key, 4)

    B, C, H, W = 2, 64, 16, 16          # in_planes must be >= 16 (fc1: C -> C//16)
    Cr = C // 16

    x = jax.random.normal(k_x, (B, C, H, W), dtype=jnp.float32)
    # Deterministic synthetic weights (Conv2d 1x1, bias=False => plain matrices)
    w1 = jax.random.normal(k_w1, (Cr, C), dtype=jnp.float32) * 0.1   # fc1.weight.squeeze()
    w2 = jax.random.normal(k_w2, (C, Cr), dtype=jnp.float32) * 0.1   # fc2.weight.squeeze()

    # tile_hw=128 so HW=256 runs as 2 pipelined reduction steps (exercises the
    # scratch-accumulator path rather than a single full-slab block).
    out = jax.block_until_ready(channel_attention(x, w1, w2, tile_hw=128))
    ref = channel_attention_ref(x, w1, w2)
    assert out.shape == (B, C, 1, 1), out.shape
    assert jnp.allclose(out, ref, atol=1e-5, rtol=1e-5), "mismatch (aligned tiles)"

    # Ragged spatial extent (HW = 13*13 = 169, not a multiple of the 128-lane
    # tile): exercises the masked last tile.
    x2 = jax.random.normal(k_x2, (B, C, 13, 13), dtype=jnp.float32)
    out2 = jax.block_until_ready(channel_attention(x2, w1, w2, tile_hw=128))
    ref2 = channel_attention_ref(x2, w1, w2)
    assert jnp.allclose(out2, ref2, atol=1e-5, rtol=1e-5), "mismatch (ragged tiles)"

    # Default (large-tile) path: single full-extent spatial block.
    out3 = jax.block_until_ready(channel_attention(x, w1, w2))
    assert jnp.allclose(out3, ref, atol=1e-5, rtol=1e-5), "mismatch (full block)"

    print("KERNEL_OK")
</pallas_src>

<mosaic_0001>
module attributes {stable_mosaic.version = 11 : i64} {
  func.func @_pool_kernel(%arg0: i32, %arg1: i32, %arg2: i32, %arg3: memref<1x64x128xf32, #tpu.memory_space<vmem>>, %arg4: memref<1x64x2xf32, #tpu.memory_space<vmem>>, %arg5: memref<64x1xf32, #tpu.memory_space<vmem>>, %arg6: memref<64x1xf32, #tpu.memory_space<vmem>>) attributes {dimension_semantics = [#tpu.dimension_semantics<parallel>, #tpu.dimension_semantics<parallel>, #tpu.dimension_semantics<arbitrary>], iteration_bounds = array<i64: 2, 1, 2>, scalar_prefetch = 0 : i64, scratch_operands = 2 : i64, tpu.core_type = #tpu.core_type<tc>, window_params = [{transform_indices = @transform_0, window_bounds = array<i64: 1, 64, 128>}, {transform_indices = @transform_1, window_bounds = array<i64: 1, 64, 2>}]} {
    %c0_i32 = arith.constant 0 : i32
    %0 = arith.cmpi eq, %arg2, %c0_i32 : i32
    %1 = arith.extui %0 : i1 to i32
    %c0_i32_0 = arith.constant 0 : i32
    %2 = arith.cmpi ne, %1, %c0_i32_0 : i32
    scf.if %2 {
      %cst_13 = arith.constant 0.000000e+00 : f32
      %18 = vector.broadcast %cst_13 : f32 to vector<64x1xf32>
      %c0_14 = arith.constant 0 : index
      %c0_15 = arith.constant 0 : index
      %19 = vector.load %arg5[%c0_14, %c0_15] : memref<64x1xf32, #tpu.memory_space<vmem>>, vector<64x1xf32>
      tpu.vector_store %arg5[%c0_14, %c0_15], %18 {strides = array<i32>} : memref<64x1xf32, #tpu.memory_space<vmem>>, vector<64x1xf32>,
      %cst_16 = arith.constant 0xFF800000 : f32
      %20 = vector.broadcast %cst_16 : f32 to vector<64x1xf32>
      %c0_17 = arith.constant 0 : index
      %c0_18 = arith.constant 0 : index
      %21 = vector.load %arg6[%c0_17, %c0_18] : memref<64x1xf32, #tpu.memory_space<vmem>>, vector<64x1xf32>
      tpu.vector_store %arg6[%c0_17, %c0_18], %20 {strides = array<i32>} : memref<64x1xf32, #tpu.memory_space<vmem>>, vector<64x1xf32>,
    } else {
    }
    %c0 = arith.constant 0 : index
    %c0_1 = arith.constant 0 : index
    %c0_2 = arith.constant 0 : index
    %3 = vector.load %arg3[%c0, %c0_1, %c0_2] : memref<1x64x128xf32, #tpu.memory_space<vmem>>, vector<1x64x128xf32>
    %4 = vector.shape_cast %3 : vector<1x64x128xf32> to vector<64x128xf32>
    %c0_3 = arith.constant 0 : index
    %c0_4 = arith.constant 0 : index
    %5 = vector.load %arg5[%c0_3, %c0_4] : memref<64x1xf32, #tpu.memory_space<vmem>>, vector<64x1xf32>
    %cst = arith.constant dense<0.000000e+00> : vector<64xf32>
    %6 = vector.multi_reduction <add>, %4, %cst [1] : vector<64x128xf32> to vector<64xf32>
    %7 = vector.shape_cast %6 : vector<64xf32> to vector<64x1xf32>
    %8 = arith.addf %5, %7 : vector<64x1xf32>
    %c0_5 = arith.constant 0 : index
    %c0_6 = arith.constant 0 : index
    %9 = vector.load %arg5[%c0_5, %c0_6] : memref<64x1xf32, #tpu.memory_space<vmem>>, vector<64x1xf32>
    tpu.vector_store %arg5[%c0_5, %c0_6], %8 {strides = array<i32>} : memref<64x1xf32, #tpu.memory_space<vmem>>, vector<64x1xf32>,
    %c0_7 = arith.constant 0 : index
    %c0_8 = arith.constant 0 : index
    %10 = vector.load %arg6[%c0_7, %c0_8] : memref<64x1xf32, #tpu.memory_space<vmem>>, vector<64x1xf32>
    %cst_9 = arith.constant dense<0xFF800000> : vector<64xf32>
    %11 = vector.multi_reduction <maximumf>, %4, %cst_9 [1] : vector<64x128xf32> to vector<64xf32>
    %12 = vector.shape_cast %11 : vector<64xf32> to vector<64x1xf32>
    %13 = arith.maximumf %10, %12 : vector<64x1xf32>
    %c0_10 = arith.constant 0 : index
    %c0_11 = arith.constant 0 : index
    %14 = vector.load %arg6[%c0_10, %c0_11] : memref<64x1xf32, #tpu.memory_space<vmem>>, vector<64x1xf32>
    tpu.vector_store %arg6[%c0_10, %c0_11], %13 {strides = array<i32>} : memref<64x1xf32, #tpu.memory_space<vmem>>, vector<64x1xf32>,
    %c1_i32 = arith.constant 1 : i32
    %15 = arith.cmpi eq, %arg2, %c1_i32 : i32
    %16 = arith.extui %15 : i1 to i32
    %c0_i32_12 = arith.constant 0 : i32
    %17 = arith.cmpi ne, %16, %c0_i32_12 : i32
    scf.if %17 {
      %c0_13 = arith.constant 0 : index
      %c0_14 = arith.constant 0 : index
      %18 = vector.load %arg5[%c0_13, %c0_14] : memref<64x1xf32, #tpu.memory_space<vmem>>, vector<64x1xf32>
      %cst_15 = arith.constant 3.906250e-03 : f32
      %19 = vector.broadcast %cst_15 : f32 to vector<64x1xf32>
      %20 = arith.mulf %18, %19 : vector<64x1xf32>
      %c0_16 = arith.constant 0 : index
      %c0_17 = arith.constant 0 : index
      %c0_18 = arith.constant 0 : index
      %21 = vector.load %arg4[%c0_16, %c0_17, %c0_18] : memref<1x64x2xf32, #tpu.memory_space<vmem>>, vector<1x64x1xf32>
      %22 = vector.shape_cast %21 : vector<1x64x1xf32> to vector<64x1xf32>
      %23 = vector.shape_cast %20 : vector<64x1xf32> to vector<1x64x1xf32>
      tpu.vector_store %arg4[%c0_16, %c0_17, %c0_18], %23 {strides = array<i32>} : memref<1x64x2xf32, #tpu.memory_space<vmem>>, vector<1x64x1xf32>,
      %c0_19 = arith.constant 0 : index
      %c0_20 = arith.constant 0 : index
      %24 = vector.load %arg6[%c0_19, %c0_20] : memref<64x1xf32, #tpu.memory_space<vmem>>, vector<64x1xf32>
      %c0_21 = arith.constant 0 : index
      %c0_22 = arith.constant 0 : index
      %c1 = arith.constant 1 : index
      %25 = vector.load %arg4[%c0_21, %c0_22, %c1] : memref<1x64x2xf32, #tpu.memory_space<vmem>>, vector<1x64x1xf32>
      %26 = vector.shape_cast %25 : vector<1x64x1xf32> to vector<64x1xf32>
      %27 = vector.shape_cast %24 : vector<64x1xf32> to vector<1x64x1xf32>
      tpu.vector_store %arg4[%c0_21, %c0_22, %c1], %27 {strides = array<i32>} : memref<1x64x2xf32, #tpu.memory_space<vmem>>, vector<1x64x1xf32>,
    } else {
    }
    return
  }
  func.func @transform_0(%arg0: i32, %arg1: i32, %arg2: i32) -> (i32, i32, i32) {
    %c0_i32 = arith.constant 0 : i32
    return %arg0, %arg1, %arg2 : i32, i32, i32
  }
  func.func @transform_1(%arg0: i32, %arg1: i32, %arg2: i32) -> (i32, i32, i32) {
    %c0_i32 = arith.constant 0 : i32
    %c0_i32_0 = arith.constant 0 : i32
    return %arg0, %arg1, %c0_i32 : i32, i32, i32
  }
}

</mosaic_0001>

<llo_original>
// kernel: tpu_custom_call.1
$region0: #{tpu_custom_call.1}
  #allocation0 [shape = 'u32[]', space=smem, size = 0x4, offset = 0x4, fixed_abs, tag = 'smem constant byte address 0x4 - core index']
  #allocation1 [shape = 'u32[144,128]{1,0:T(1,128)}', space=vmem, size = 0x12000, scoped, tag = 'internal scratch']
  #allocation2 [shape = 'f32[64,1]{1,0:T(8,128)}', space=vmem, size = 0x8000, scoped, tag = 'scratch operand']
  #allocation3 [shape = 'f32[64,1]{1,0:T(8,128)}', space=vmem, size = 0x8000, scoped, tag = 'scratch operand']
  %s0 = inlined_call_operand.hbm [shape: f32[2,64,256], index: 0, kind: input, shape index: {}]
  %s1 = inlined_call_operand.vmem [shape: f32[2,64,2], index: 1, kind: output, shape index: {}]
  %s2 = sld [smem:[#allocation0]]
  $region49: #{tpu_custom_call.1} parent=0
    _
  %s4 = ssub.s32 1, %s2
  %s5 = scalar_select 0, %s4, %s2
  $region1: #{tpu_custom_call.1} parent=0
    #allocation4 [shape = 'u8[65536]{0}', space=vmem, size = 0x10000, scoped, tag = 'input window, operand 0']
    #allocation5 [shape = 's32[2]{0}', space=sflag, size = 0x8, scoped, tag = 'scoped memory for tpu_custom_call.1']
    %6 = vsyncpa [#allocation5], 0
    %s7 = scalar_lea.sflag [#allocation5], 1
    %8 = vsyncpa %s7, 0
    loop: start=0, step=1, limit=6
    $region2: #{tpu_custom_call.1} parent=1 // loop_pre_header
      _
    $region3: #{tpu_custom_call.1} parent=1 // loop_header
      %s10 = sphi 0, %s14
      %p11 = scmp.ge.s32.totalorder %s10, 6
      %s17 = sphi 0, %s36
      %s18 = sphi 0, %s32
      %s19 = sphi 0, %s28
      %s20 = sphi 0, %s17
      %s21 = sphi 0, %s18
      %s22 = sphi 0, %s19
      %s23 = sphi 0, %s20
      %s24 = sphi 0, %s21
      %s25 = sphi 0, %s22
      %s43 = sphi 0, %s45
      %s46 = sphi 0, %s43
      %s47 = sphi 0, %s46
      %s63 = sphi 0, %s47
      %s71 = sphi 0, %s73
      %s74 = sphi 0, %s71
      %s75 = sphi 0, %s74
      %s91 = sphi 0, %s75
    $region4: #{tpu_custom_call.1} parent=1 // loop_header_branch
      %13 = sbr.rel (%p11) target = $region8
    $region5: #{tpu_custom_call.1} parent=1 // loop_body
      %s15 = ssub.s32 %s10, 1
      %s16 = ssub.s32 %s10, 2
      %s26 = sadd.s32 1, %s19
      %p27 = scmp.ge.s32.totalorder %s26, 2
      %s28 = scalar_select %p27, 0, %s26
      %s29 = sadd.s32 1, %s18
      %s30 = scalar_select %p27, %s29, %s18
      %p31 = scmp.ge.s32.totalorder %s30, 1
      %s32 = scalar_select %p31, 0, %s30
      %s33 = sadd.s32 1, %s17
      %s34 = scalar_select %p31, %s33, %s17
      %p35 = scmp.ge.s32.totalorder %s34, 2
      %s36 = scalar_select %p35, 0, %s34
      %s37 = ssub.s32 %s17, %s36
      %s38 = ssub.s32 %s18, %s32
      %s39 = sor.u32 %s37, %s38
      %s40 = ssub.s32 %s19, %s28
      %s41 = sor.u32 %s39, %s40
      %p42 = scmp.eq.s32.totalorder %s41, 0
      %s44 = sadd.s32 %s43, 1
      %s45 = scalar_select %p42, %s43, %s44
      %p48 = pneg %p42
      %p49 = scmp.eq.s32.totalorder %s10, 3
      %p50 = por %p48, %p49
      %p51 = scmp.ne.s32.totalorder %s43, %s46
      %p52 = scmp.eq.s32.totalorder %s10, 0
      %p53 = por %p51, %p52
      %p54 = scmp.ne.s32.totalorder %s43, %s46
      %p55 = scmp.eq.s32.totalorder %s15, 3
      %p56 = por %p54, %p55
      %p57 = scmp.ne.s32.totalorder %s46, %s47
      %p58 = scmp.eq.s32.totalorder %s15, 0
      %p59 = por %p57, %p58
      %p60 = scmp.ne.s32.totalorder %s46, %s47
      %p61 = scmp.eq.s32.totalorder %s16, 3
      %p62 = por %p60, %p61
      %p64 = scmp.ne.s32.totalorder %s47, %s63
      %p65 = scmp.eq.s32.totalorder %s16, 0
      %p66 = por %p64, %p65
      %s67 = ssub.s32 %s17, %s36
      %s68 = ssub.s32 %s18, %s32
      %s69 = sor.u32 %s67, %s68
      %p70 = scmp.eq.s32.totalorder %s69, 0
      %s72 = sadd.s32 %s71, 1
      %s73 = scalar_select %p70, %s71, %s72
      %p76 = pneg %p70
      %p77 = scmp.eq.s32.totalorder %s10, 3
      %p78 = por %p76, %p77
      %p79 = scmp.ne.s32.totalorder %s71, %s74
      %p80 = scmp.eq.s32.totalorder %s10, 0
      %p81 = por %p79, %p80
      %p82 = scmp.ne.s32.totalorder %s71, %s74
      %p83 = scmp.eq.s32.totalorder %s15, 3
      %p84 = por %p82, %p83
      %p85 = scmp.ne.s32.totalorder %s74, %s75
      %p86 = scmp.eq.s32.totalorder %s15, 0
      %p87 = por %p85, %p86
      %p88 = scmp.ne.s32.totalorder %s74, %s75
      %p89 = scmp.eq.s32.totalorder %s16, 3
      %p90 = por %p88, %p89
      %p92 = scmp.ne.s32.totalorder %s75, %s91
      %p93 = scmp.eq.s32.totalorder %s16, 0
      %p94 = por %p92, %p93
      %p95 = scmp.le.s32.totalorder 1, %s10
      %p96 = scmp.lt.s32.totalorder %s10, 5
      %p97 = pnand %p95, %p96
      %p98 = pneg %p97
      // Predicated region
      $region9: #{tpu_custom_call.1} parent=5 // pred_check
        _
      $region10: #{tpu_custom_call.1} parent=5 // pred_check_branch
        %100 = sbr.rel (%p97) target = $region12
      $region11: #{tpu_custom_call.1} parent=5 // pred_region
        %s101 = ssub.s32 %s10, 1
      $region12: #{tpu_custom_call.1} parent=5 // pred_fallthru
        _
      %p102 = scmp.lt.s32.totalorder %s10, 4
      // Predicated region
      $region13: #{tpu_custom_call.1} parent=5 // pred_check
        %p103 = pneg %p102
      $region14: #{tpu_custom_call.1} parent=5 // pred_check_branch
        %105 = sbr.rel (%p103) target = $region16
      $region15: #{tpu_custom_call.1} parent=5 // pred_region
        // Predicated region
        $region17: #{tpu_custom_call.1} parent=15 // pred_check
          %p106 = pneg %p53
        $region18: #{tpu_custom_call.1} parent=15 // pred_check_branch
          %108 = sbr.rel (%p106) target = $region20
        $region19: #{tpu_custom_call.1} parent=15 // pred_region
          %s109 = sand.u32 %s43, 1
          %s110 = scalar_lea.sflag [#allocation5], %s109
          %s111 = sand.u32 %s43, 1
          %s112 = smul.addr %s111, 64
          %s113 = scalar_lea.vmem [#allocation4], %s112
          %s114 = smul.u32 8, %s18
          %s116 = ssub.s32 1024, 1024
          %117 = vsyncadd %s110, %s116
          %s118 = smul.addr %s114, 2
          %s119 = sadd.s32 %s19, %s118
          %s120 = smul.addr %s17, 16
          %s121 = sadd.s32 %s119, %s120
          %s122 = smul.addr %s121, 128
          %s123 = scalar_lea.hbm %s0, %s122
          %s124 = sshll.u32 %s113, 4
          %s125 = int_to_ptr.vmem [resolvable:$true] %s124
          %130 = dma.hbm_to_vmem [thread:$0]  %s123, 1024, %s125, %s110, 256, 128, 8
        $region20: #{tpu_custom_call.1} parent=15 // pred_fallthru
          _
      $region16: #{tpu_custom_call.1} parent=5 // pred_fallthru
        _
      %p131 = scmp.le.s32.totalorder 1, %s10
      %p132 = scmp.lt.s32.totalorder %s10, 5
      %p133 = pnand %p131, %p132
      %p134 = pneg %p133
      // Predicated region
      $region21: #{tpu_custom_call.1} parent=5 // pred_check
        _
      $region22: #{tpu_custom_call.1} parent=5 // pred_check_branch
        %136 = sbr.rel (%p133) target = $region24
      $region23: #{tpu_custom_call.1} parent=5 // pred_region
        %s137 = ssub.s32 %s10, 1
        %s138 = sand.u32 %s46, 1
        %s139 = scalar_lea.sflag [#allocation5], %s138
        %s140 = sand.u32 %s46, 1
        %s141 = smul.addr %s140, 64
        %s142 = scalar_lea.vmem [#allocation4], %s141
        // Predicated region
        $region25: #{tpu_custom_call.1} parent=23 // pred_check
          %p143 = pneg %p59
        $region26: #{tpu_custom_call.1} parent=23 // pred_check_branch
          %145 = sbr.rel (%p143) target = $region28
        $region27: #{tpu_custom_call.1} parent=23 // pred_region
          %146 = dma.done %s139, 1024
        $region28: #{tpu_custom_call.1} parent=23 // pred_fallthru
          _
        %s147 = sand.u32 %s46, 1
        %s148 = scalar_lea.sflag [#allocation5], %s147
        %s149 = sand.u32 %s46, 1
        %s150 = smul.addr %s149, 64
        %s151 = scalar_lea.vmem [#allocation4], %s150
        %p152 = pneg %p59
        %p153 = pneg %p56
        %p154 = pneg %p87
        %p155 = pneg %p84
        %s156 = smul.u32 8, %s21
        %p157 = scmp.lt.s32.totalorder %s20, 1
        %s158 = scalar_select %p157, %s20, 1
        %p159 = scmp.lt.s32.totalorder %s156, 7
        %s160 = scalar_select %p159, %s156, 7
        %s161 = smul.addr %s158, 8
        %s162 = sadd.s32 %s160, %s161
        %s163 = smul.addr %s162, 8
        %s164 = scalar_lea.vmem %s1, %s163
        %s165 = smul.u32 8, %s21
        %s166 = smul.u32 8, %s21
        %p167 = scmp.lt.s32.totalorder %s20, 1
        %s168 = scalar_select %p167, %s20, 1
        %p169 = scmp.lt.s32.totalorder %s166, 7
        %s170 = scalar_select %p169, %s166, 7
        %s171 = smul.addr %s168, 8
        %s172 = sadd.s32 %s170, %s171
        %s173 = smul.addr %s172, 8
        %s174 = scalar_lea.vmem %s1, %s173
        %s175 = smul.u32 8, %s21
        %p176 = scmp.eq.s32.totalorder %s22, 0
        // Predicated region
        $region29: #{tpu_custom_call.1} parent=23 // pred_check
          %p177 = pneg %p176
        $region30: #{tpu_custom_call.1} parent=23 // pred_check_branch
          %179 = sbr.rel (%p177) target = $region32
        $region31: #{tpu_custom_call.1} parent=23 // pred_region
          %vm180 = vcmask 7168
          %181 = vst.msk [vmem:[#allocation2] sm:$0xff] %vm180, 0.0
          %182 = vst.msk [vmem:[#allocation2 + $0x8] sm:$0xff] %vm180, 0.0
          %183 = vst.msk [vmem:[#allocation2 + $0x10] sm:$0xff] %vm180, 0.0
          %184 = vst.msk [vmem:[#allocation2 + $0x18] sm:$0xff] %vm180, 0.0
          %185 = vst.msk [vmem:[#allocation2 + $0x20] sm:$0xff] %vm180, 0.0
          %186 = vst.msk [vmem:[#allocation2 + $0x28] sm:$0xff] %vm180, 0.0
          %187 = vst.msk [vmem:[#allocation2 + $0x30] sm:$0xff] %vm180, 0.0
          %188 = vst.msk [vmem:[#allocation2 + $0x38] sm:$0xff] %vm180, 0.0
          %189 = vst.msk [vmem:[#allocation3] sm:$0xff] %vm180, -inf
          %190 = vst.msk [vmem:[#allocation3 + $0x8] sm:$0xff] %vm180, -inf
          %191 = vst.msk [vmem:[#allocation3 + $0x10] sm:$0xff] %vm180, -inf
          %192 = vst.msk [vmem:[#allocation3 + $0x18] sm:$0xff] %vm180, -inf
          %193 = vst.msk [vmem:[#allocation3 + $0x20] sm:$0xff] %vm180, -inf
          %194 = vst.msk [vmem:[#allocation3 + $0x28] sm:$0xff] %vm180, -inf
          %195 = vst.msk [vmem:[#allocation3 + $0x30] sm:$0xff] %vm180, -inf
          %196 = vst.msk [vmem:[#allocation3 + $0x38] sm:$0xff] %vm180, -inf
        $region32: #{tpu_custom_call.1} parent=23 // pred_fallthru
          _
        %v197 = vld [vmem:[%s142] sm:$0xff]
        %v198 = vld [vmem:[%s142 + $0x8] sm:$0xff]
        %v199 = vld [vmem:[%s142 + $0x10] sm:$0xff]
        %v200 = vld [vmem:[%s142 + $0x18] sm:$0xff]
        %v201 = vld [vmem:[%s142 + $0x20] sm:$0xff]
        %v202 = vld [vmem:[%s142 + $0x28] sm:$0xff]
        %v203 = vld [vmem:[%s142 + $0x30] sm:$0xff]
        %v204 = vld [vmem:[%s142 + $0x38] sm:$0xff]
        %v205 = vld [vmem:[#allocation2] sm:$0xff]
        %v206 = vld [vmem:[#allocation2 + $0x8] sm:$0xff]
        %v207 = vld [vmem:[#allocation2 + $0x10] sm:$0xff]
        %v208 = vld [vmem:[#allocation2 + $0x18] sm:$0xff]
        %v209 = vld [vmem:[#allocation2 + $0x20] sm:$0xff]
        %v210 = vld [vmem:[#allocation2 + $0x28] sm:$0xff]
        %v211 = vld [vmem:[#allocation2 + $0x30] sm:$0xff]
        %v212 = vld [vmem:[#allocation2 + $0x38] sm:$0xff]
        %213 = vadd.xlane.f32.xlu0 %v197
        %v214 = vpop.xlane.xlu0 %213
        %215 = vadd.xlane.f32.xlu0 %v198
        %v216 = vpop.xlane.xlu0 %215
        %217 = vadd.xlane.f32.xlu0 %v199
        %v218 = vpop.xlane.xlu0 %217
        %219 = vadd.xlane.f32.xlu0 %v200
        %v220 = vpop.xlane.xlu0 %219
        %221 = vadd.xlane.f32.xlu0 %v201
        %v222 = vpop.xlane.xlu0 %221
        %223 = vadd.xlane.f32.xlu0 %v202
        %v224 = vpop.xlane.xlu0 %223
        %225 = vadd.xlane.f32.xlu0 %v203
        %v226 = vpop.xlane.xlu0 %225
        %227 = vadd.xlane.f32.xlu0 %v204
        %v228 = vpop.xlane.xlu0 %227
        %v229 = vadd.f32 %v205, %v214
        %v230 = vadd.f32 %v206, %v216
        %v231 = vadd.f32 %v207, %v218
        %v232 = vadd.f32 %v208, %v220
        %v233 = vadd.f32 %v209, %v222
        %v234 = vadd.f32 %v210, %v224
        %v235 = vadd.f32 %v211, %v226
        %v236 = vadd.f32 %v212, %v228
        %vm237 = vcmask 7168
        %238 = vst.msk [vmem:[#allocation2] sm:$0xff] %vm237, %v229
        %239 = vst.msk [vmem:[#allocation2 + $0x8] sm:$0xff] %vm237, %v230
        %240 = vst.msk [vmem:[#allocation2 + $0x10] sm:$0xff] %vm237, %v231
        %241 = vst.msk [vmem:[#allocation2 + $0x18] sm:$0xff] %vm237, %v232
        %242 = vst.msk [vmem:[#allocation2 + $0x20] sm:$0xff] %vm237, %v233
        %243 = vst.msk [vmem:[#allocation2 + $0x28] sm:$0xff] %vm237, %v234
        %244 = vst.msk [vmem:[#allocation2 + $0x30] sm:$0xff] %vm237, %v235
        %245 = vst.msk [vmem:[#allocation2 + $0x38] sm:$0xff] %vm237, %v236
        %v246 = vld [vmem:[#allocation3] sm:$0xff]
        %v247 = vld [vmem:[#allocation3 + $0x8] sm:$0xff]
        %v248 = vld [vmem:[#allocation3 + $0x10] sm:$0xff]
        %v249 = vld [vmem:[#allocation3 + $0x18] sm:$0xff]
        %v250 = vld [vmem:[#allocation3 + $0x20] sm:$0xff]
        %v251 = vld [vmem:[#allocation3 + $0x28] sm:$0xff]
        %v252 = vld [vmem:[#allocation3 + $0x30] sm:$0xff]
        %v253 = vld [vmem:[#allocation3 + $0x38] sm:$0xff]
        %254 = vmax.xlane.f32.xlu0 %v197
        %v255 = vpop.xlane.xlu0 %254
        %256 = vmax.xlane.f32.xlu0 %v198
        %v257 = vpop.xlane.xlu0 %256
        %258 = vmax.xlane.f32.xlu0 %v199
        %v259 = vpop.xlane.xlu0 %258
        %260 = vmax.xlane.f32.xlu0 %v200
        %v261 = vpop.xlane.xlu0 %260
        %262 = vmax.xlane.f32.xlu0 %v201
        %v263 = vpop.xlane.xlu0 %262
        %264 = vmax.xlane.f32.xlu0 %v202
        %v265 = vpop.xlane.xlu0 %264
        %266 = vmax.xlane.f32.xlu0 %v203
        %v267 = vpop.xlane.xlu0 %266
        %268 = vmax.xlane.f32.xlu0 %v204
        %v269 = vpop.xlane.xlu0 %268
        %v270 = vmax.f32 %v246, %v255
        %v271 = vmax.f32 %v247, %v257
        %v272 = vmax.f32 %v248, %v259
        %v273 = vmax.f32 %v249, %v261
        %v274 = vmax.f32 %v250, %v263
        %v275 = vmax.f32 %v251, %v265
        %v276 = vmax.f32 %v252, %v267
        %v277 = vmax.f32 %v253, %v269
        %278 = vst.msk [vmem:[#allocation3] sm:$0xff] %vm237, %v270
        %279 = vst.msk [vmem:[#allocation3 + $0x8] sm:$0xff] %vm237, %v271
        %280 = vst.msk [vmem:[#allocation3 + $0x10] sm:$0xff] %vm237, %v272
        %281 = vst.msk [vmem:[#allocation3 + $0x18] sm:$0xff] %vm237, %v273
        %282 = vst.msk [vmem:[#allocation3 + $0x20] sm:$0xff] %vm237, %v274
        %283 = vst.msk [vmem:[#allocation3 + $0x28] sm:$0xff] %vm237, %v275
        %284 = vst.msk [vmem:[#allocation3 + $0x30] sm:$0xff] %vm237, %v276
        %285 = vst.msk [vmem:[#allocation3 + $0x38] sm:$0xff] %vm237, %v277
        %p286 = scmp.eq.s32.totalorder %s22, 1
        // Predicated region
        $region33: #{tpu_custom_call.1} parent=23 // pred_check
          %p287 = pneg %p286
        $region34: #{tpu_custom_call.1} parent=23 // pred_check_branch
          %289 = sbr.rel (%p287) target = $region36
        $region35: #{tpu_custom_call.1} parent=23 // pred_region
          %v290 = vld [vmem:[#allocation2] sm:$0xff]
          %v291 = vld [vmem:[#allocation2 + $0x8] sm:$0xff]
          %v292 = vld [vmem:[#allocation2 + $0x10] sm:$0xff]
          %v293 = vld [vmem:[#allocation2 + $0x18] sm:$0xff]
          %v294 = vld [vmem:[#allocation2 + $0x20] sm:$0xff]
          %v295 = vld [vmem:[#allocation2 + $0x28] sm:$0xff]
          %v296 = vld [vmem:[#allocation2 + $0x30] sm:$0xff]
          %v297 = vld [vmem:[#allocation2 + $0x38] sm:$0xff]
          %v298 = vmul.f32 %v290, 0.00390625
          %v299 = vmul.f32 %v291, 0.00390625
          %v300 = vmul.f32 %v292, 0.00390625
          %v301 = vmul.f32 %v293, 0.00390625
          %v302 = vmul.f32 %v294, 0.00390625
          %v303 = vmul.f32 %v295, 0.00390625
          %v304 = vmul.f32 %v296, 0.00390625
          %v305 = vmul.f32 %v297, 0.00390625
          %306 = vst.msk [vmem:[%s174] sm:$0xff] %vm237, %v298
          %307 = vst.msk [vmem:[%s174 + $0x8] sm:$0xff] %vm237, %v299
          %308 = vst.msk [vmem:[%s174 + $0x10] sm:$0xff] %vm237, %v300
          %309 = vst.msk [vmem:[%s174 + $0x18] sm:$0xff] %vm237, %v301
          %310 = vst.msk [vmem:[%s174 + $0x20] sm:$0xff] %vm237, %v302
          %311 = vst.msk [vmem:[%s174 + $0x28] sm:$0xff] %vm237, %v303
          %312 = vst.msk [vmem:[%s174 + $0x30] sm:$0xff] %vm237, %v304
          %313 = vst.msk [vmem:[%s174 + $0x38] sm:$0xff] %vm237, %v305
          %v314 = vld [vmem:[#allocation3] sm:$0xff]
          %v315 = vld [vmem:[#allocation3 + $0x8] sm:$0xff]
          %v316 = vld [vmem:[#allocation3 + $0x10] sm:$0xff]
          %v317 = vld [vmem:[#allocation3 + $0x18] sm:$0xff]
          %v318 = vld [vmem:[#allocation3 + $0x20] sm:$0xff]
          %v319 = vld [vmem:[#allocation3 + $0x28] sm:$0xff]
          %v320 = vld [vmem:[#allocation3 + $0x30] sm:$0xff]
          %v321 = vld [vmem:[#allocation3 + $0x38] sm:$0xff]
          %330 = vrot.lane.b32.xlu0 %v314, 1
          %v331 = vpop.permute.xlu0 %330
          %332 = vrot.lane.b32.xlu0 %v315, 1
          %v333 = vpop.permute.xlu0 %332
          %334 = vrot.lane.b32.xlu0 %v316, 1
          %v335 = vpop.permute.xlu0 %334
          %336 = vrot.lane.b32.xlu0 %v317, 1
          %v337 = vpop.permute.xlu0 %336
          %338 = vrot.lane.b32.xlu0 %v318, 1
          %v339 = vpop.permute.xlu0 %338
          %340 = vrot.lane.b32.xlu0 %v319, 1
          %v341 = vpop.permute.xlu0 %340
          %342 = vrot.lane.b32.xlu0 %v320, 1
          %v343 = vpop.permute.xlu0 %342
          %344 = vrot.lane.b32.xlu0 %v321, 1
          %v345 = vpop.permute.xlu0 %344
          %vm354 = vcmask 15368
          %355 = vst.msk [vmem:[%s174] sm:$0xff] %vm354, %v331
          %356 = vst.msk [vmem:[%s174 + $0x8] sm:$0xff] %vm354, %v333
          %357 = vst.msk [vmem:[%s174 + $0x10] sm:$0xff] %vm354, %v335
          %358 = vst.msk [vmem:[%s174 + $0x18] sm:$0xff] %vm354, %v337
          %359 = vst.msk [vmem:[%s174 + $0x20] sm:$0xff] %vm354, %v339
          %360 = vst.msk [vmem:[%s174 + $0x28] sm:$0xff] %vm354, %v341
          %361 = vst.msk [vmem:[%s174 + $0x30] sm:$0xff] %vm354, %v343
          %362 = vst.msk [vmem:[%s174 + $0x38] sm:$0xff] %vm354, %v345
        $region36: #{tpu_custom_call.1} parent=23 // pred_fallthru
          _
        %s363 = smul.u32 8, %s21
        %p364 = scmp.lt.s32.totalorder %s20, 1
        %s365 = scalar_select %p364, %s20, 1
        %p366 = scmp.lt.s32.totalorder %s363, 7
        %s367 = scalar_select %p366, %s363, 7
        %s368 = smul.addr %s365, 8
        %s369 = sadd.s32 %s367, %s368
        %s370 = smul.addr %s369, 8
        %s371 = scalar_lea.vmem %s1, %s370
        // Predicated region
        $region37: #{tpu_custom_call.1} parent=23 // pred_check
          %p372 = pneg %p84
        $region38: #{tpu_custom_call.1} parent=23 // pred_check_branch
          %374 = sbr.rel (%p372) target = $region40
        $region39: #{tpu_custom_call.1} parent=23 // pred_region
          %s375 = smul.u32 8, %s21
        $region40: #{tpu_custom_call.1} parent=23 // pred_fallthru
          _
      $region24: #{tpu_custom_call.1} parent=5 // pred_fallthru
        _
      %p376 = scmp.le.s32.totalorder 2, %s10
      // Predicated region
      $region41: #{tpu_custom_call.1} parent=5 // pred_check
        %p377 = pneg %p376
      $region42: #{tpu_custom_call.1} parent=5 // pred_check_branch
        %379 = sbr.rel (%p377) target = $region44
      $region43: #{tpu_custom_call.1} parent=5 // pred_region
        %s380 = ssub.s32 %s10, 2
        // Predicated region
        $region45: #{tpu_custom_call.1} parent=43 // pred_check
          %p381 = pneg %p90
        $region46: #{tpu_custom_call.1} parent=43 // pred_check_branch
          %383 = sbr.rel (%p381) target = $region48
        $region47: #{tpu_custom_call.1} parent=43 // pred_region
          %s384 = smul.u32 8, %s24
          %p385 = scmp.lt.s32.totalorder %s23, 1
          %s386 = scalar_select %p385, %s23, 1
          %p387 = scmp.lt.s32.totalorder %s384, 7
          %s388 = scalar_select %p387, %s384, 7
          %s389 = smul.addr %s386, 8
          %s390 = sadd.s32 %s388, %s389
          %s391 = smul.addr %s390, 8
          %s392 = scalar_lea.vmem %s1, %s391
        $region48: #{tpu_custom_call.1} parent=43 // pred_fallthru
          _
      $region44: #{tpu_custom_call.1} parent=5 // pred_fallthru
        _
    $region6: #{tpu_custom_call.1} parent=1 // loop_footer
      %s14 = sadd.s32 1, %s10
    $region7: #{tpu_custom_call.1} parent=1 // loop_footer_branch
      %9 = sbr.rel target = $region3
    $region8: #{tpu_custom_call.1} parent=1 // loop_exit
      _
    %393 = vsyncpa [#allocation5], 1
    %s394 = scalar_lea.sflag [#allocation5], 1
    %395 = vsyncpa %s394, 1

</llo_original>
